<compile_context>
chip_gen: v7x
topology: tpu7x:2x2x1
jax: 0.10.0
libtpu: 0.0.40
codegen_flags: <defaults>
</compile_context>

<pallas_src>
import functools
import math

import jax
import jax.numpy as jnp
from jax.experimental import pallas as pl
from jax.experimental.pallas import tpu as pltpu


def _full_spec(shape):
    nd = len(shape)
    return pl.BlockSpec(shape, lambda *_, nd=nd: (0,) * nd)


# ----------------------------------------------------------------------------
# 1) Fused 2-layer GCN image encoder:  A @ relu(A @ (X W1) + b1) @ W2 + b2
# ----------------------------------------------------------------------------
def _gcn_kernel(x_ref, adj_ref, w1_ref, b1_ref, w2_ref, b2_ref, o_ref):
    x = x_ref[...]                                     # bf16 (N, Din)
    a = adj_ref[...]                                   # bf16 (N, N)
    t1 = jnp.dot(x, w1_ref[...], preferred_element_type=jnp.float32)
    h1 = jnp.dot(a, t1.astype(a.dtype),
                 preferred_element_type=jnp.float32) + b1_ref[...]
    h1 = jnp.maximum(h1, 0.0)
    t2 = jnp.dot(h1.astype(w2_ref.dtype), w2_ref[...],
                 preferred_element_type=jnp.float32)
    out = jnp.dot(a, t2.astype(a.dtype),
                  preferred_element_type=jnp.float32) + b2_ref[...]
    o_ref[...] = out.astype(o_ref.dtype)


def pallas_gcn(x, adj, w1, b1, w2, b2):
    N = x.shape[0]
    Dout = w2.shape[1]
    args = [x.astype(jnp.bfloat16), adj.astype(jnp.bfloat16),
            w1.astype(jnp.bfloat16), b1.reshape(1, -1).astype(jnp.float32),
            w2.astype(jnp.bfloat16), b2.reshape(1, -1).astype(jnp.float32)]
    return pl.pallas_call(
        _gcn_kernel,
        grid=(1,),
        out_shape=jax.ShapeDtypeStruct((N, Dout), jnp.float32),
        in_specs=[_full_spec(a.shape) for a in args],
        out_specs=_full_spec((N, Dout)),
    )(*args)


# ----------------------------------------------------------------------------
# 2) Fused image-feature L2-norm + meta-net MLP (linear1 -> relu -> linear2)
# ----------------------------------------------------------------------------
def _imf_meta_kernel(imf_ref, wm1_ref, bm1_ref, wm2_ref, bm2_ref,
                     imfn_ref, bias_ref):
    imf = imf_ref[...]                                 # f32 (B, gnn_out)
    imf_n = imf * jax.lax.rsqrt(jnp.sum(imf * imf, axis=-1, keepdims=True) + 1e-12)
    hid = jnp.dot(imf_n.astype(wm1_ref.dtype), wm1_ref[...],
                  preferred_element_type=jnp.float32) + bm1_ref[...]
    hid = jnp.maximum(hid, 0.0)                        # tiny hidden stays in vregs
    bias = jnp.dot(hid.astype(wm2_ref.dtype), wm2_ref[...],
                   preferred_element_type=jnp.float32) + bm2_ref[...]
    imfn_ref[...] = imf_n.astype(imfn_ref.dtype)
    bias_ref[...] = bias.astype(bias_ref.dtype)


def pallas_imf_meta(imf_raw, wm1, bm1, wm2, bm2):
    B, G = imf_raw.shape
    Dctx = wm2.shape[1]
    args = [imf_raw.astype(jnp.float32),
            wm1.astype(jnp.bfloat16), bm1.reshape(1, -1).astype(jnp.float32),
            wm2.astype(jnp.bfloat16), bm2.reshape(1, -1).astype(jnp.float32)]
    return pl.pallas_call(
        _imf_meta_kernel,
        grid=(1,),
        out_shape=(jax.ShapeDtypeStruct((B, G), jnp.float32),
                   jax.ShapeDtypeStruct((B, Dctx), jnp.float32)),
        in_specs=[_full_spec(a.shape) for a in args],
        out_specs=(_full_spec((B, G)), _full_spec((B, Dctx))),
    )(*args)


# ----------------------------------------------------------------------------
# 3) CLIP-style transformer block: pos-emb add + pre-LN causal MHA + QuickGELU MLP
#    Heads are batched into the leading axis (single einsum pair, no per-head loop).
#    Gridded over Nb ("parallel") so both TensorCores are used on v7x.
# ----------------------------------------------------------------------------
def _text_block_kernel(x_ref, pos_ref, ln1g_ref, ln1b_ref, wqkv_ref, bqkv_ref,
                       wo_ref, bo_ref, ln2g_ref, ln2b_ref,
                       wfc_ref, bfc_ref, wproj_ref, bproj_ref, o_ref,
                       *, num_heads):
    x = x_ref[...].astype(jnp.float32) + pos_ref[...]  # (nb, L, D) f32
    nb, L, D = x.shape
    hd = D // num_heads
    scale = 1.0 / math.sqrt(hd)

    def ln(v, g, b):
        mu = jnp.mean(v, axis=-1, keepdims=True)
        var = jnp.mean((v - mu) ** 2, axis=-1, keepdims=True)
        return (v - mu) * jax.lax.rsqrt(var + 1e-5) * g + b

    def mm3(v3, w):                                    # bf16 MXU feed, f32 accumulate
        din, dout = w.shape
        return jnp.dot(v3.reshape(-1, din).astype(w.dtype), w,
                       preferred_element_type=jnp.float32).reshape(nb, L, dout)

    # --- attention ---
    h = ln(x, ln1g_ref[...], ln1b_ref[...])
    qkv = mm3(h, wqkv_ref[...]) + bqkv_ref[...]        # (nb, L, 3D) f32

    def heads(off):                                    # -> (H*nb, L, hd), head-major
        return jnp.concatenate(
            [qkv[..., off + hh * hd: off + (hh + 1) * hd] for hh in range(num_heads)],
            axis=0).astype(jnp.bfloat16)

    qh, kh, vh = heads(0), heads(D), heads(2 * D)

    row = jax.lax.broadcasted_iota(jnp.int32, (L, L), 0)
    col = jax.lax.broadcasted_iota(jnp.int32, (L, L), 1)
    causal = (col <= row)[None]                        # (1, L, L)

    s = jnp.einsum('bqd,bkd->bqk', qh, kh,
                   preferred_element_type=jnp.float32) * scale
    s = jnp.where(causal, s, -1e30)
    p = jax.nn.softmax(s, axis=-1)                     # f32
    ctx = jnp.einsum('bqk,bkd->bqd', p.astype(jnp.bfloat16), vh,
                     preferred_element_type=jnp.float32)   # (H*nb, L, hd)
    attn = jnp.concatenate(
        [ctx[hh * nb:(hh + 1) * nb] for hh in range(num_heads)], axis=-1)  # (nb, L, D)

    x = x + mm3(attn, wo_ref[...]) + bo_ref[...]

    # --- MLP (QuickGELU) ---
    h2 = ln(x, ln2g_ref[...], ln2b_ref[...])
    y = mm3(h2, wfc_ref[...]) + bfc_ref[...]
    y = y * jax.nn.sigmoid(1.702 * y)
    x = x + mm3(y, wproj_ref[...]) + bproj_ref[...]

    o_ref[...] = x.astype(o_ref.dtype)


def pallas_text_block(tx, p, num_heads):
    Nb, L, D = tx.shape
    nb_tile = Nb // 2 if Nb % 2 == 0 else Nb           # 2 grid steps -> megacore split
    weight_args = [
        p['pos_emb'].astype(jnp.float32),
        p['ln1_g'].reshape(1, -1).astype(jnp.float32),
        p['ln1_b'].reshape(1, -1).astype(jnp.float32),
        p['Wqkv'].astype(jnp.bfloat16),
        p['bqkv'].reshape(1, -1).astype(jnp.float32),
        p['Wo'].astype(jnp.bfloat16),
        p['bo'].reshape(1, -1).astype(jnp.float32),
        p['ln2_g'].reshape(1, -1).astype(jnp.float32),
        p['ln2_b'].reshape(1, -1).astype(jnp.float32),
        p['Wfc'].astype(jnp.bfloat16),
        p['bfc'].reshape(1, -1).astype(jnp.float32),
        p['Wproj'].astype(jnp.bfloat16),
        p['bproj'].reshape(1, -1).astype(jnp.float32),
    ]
    in_specs = ([pl.BlockSpec((nb_tile, L, D), lambda i: (i, 0, 0))]
                + [_full_spec(a.shape) for a in weight_args])
    return pl.pallas_call(
        functools.partial(_text_block_kernel, num_heads=num_heads),
        grid=(Nb // nb_tile,),
        out_shape=jax.ShapeDtypeStruct((Nb, L, D), jnp.bfloat16),
        in_specs=in_specs,
        out_specs=pl.BlockSpec((nb_tile, L, D), lambda i: (i, 0, 0)),
        compiler_params=pltpu.CompilerParams(dimension_semantics=("parallel",)),
    )(tx.astype(jnp.bfloat16), *weight_args)


# ----------------------------------------------------------------------------
# 4) Fused epilogue: EOT pooling FIRST -> ln_final (pooled rows only) ->
#    text projection -> text-feature L2-norm -> scaled cosine logits
# ----------------------------------------------------------------------------
def _text_head_kernel(tx_ref, onehot_ref, g_ref, b_ref, proj_ref, imf_ref,
                      scale_ref, o_ref, *, n_cls):
    tx = tx_ref[...].astype(jnp.float32)               # (Nb, L, D)
    onehot = onehot_ref[...]                           # (Nb, L) f32
    pooled = jnp.sum(onehot[:, :, None] * tx, axis=1)  # (Nb, D)  EOT rows only
    mu = jnp.mean(pooled, axis=-1, keepdims=True)
    var = jnp.mean((pooled - mu) ** 2, axis=-1, keepdims=True)
    h = (pooled - mu) * jax.lax.rsqrt(var + 1e-5) * g_ref[...] + b_ref[...]
    tf = jnp.dot(h.astype(proj_ref.dtype), proj_ref[...],
                 preferred_element_type=jnp.float32)   # (Nb, E)
    tf = tf * jax.lax.rsqrt(jnp.sum(tf * tf, axis=-1, keepdims=True) + 1e-12)
    Nb, E = tf.shape
    B = Nb // n_cls
    tf = tf.reshape(B, n_cls, E)
    imf = imf_ref[...]                                 # (B, E), already normalized
    sim = jnp.sum(imf[:, None, :] * tf, axis=-1)       # (B, n_cls)
    o_ref[...] = (scale_ref[0] * sim).astype(o_ref.dtype)


def pallas_text_head(tx, onehot, g, b, proj, imf, logit_scale_exp, n_cls):
    Nb, L, D = tx.shape
    B = imf.shape[0]
    scale = jnp.asarray(logit_scale_exp, jnp.float32).reshape(1)
    args = [tx, onehot.astype(jnp.float32),
            g.reshape(1, -1).astype(jnp.float32),
            b.reshape(1, -1).astype(jnp.float32),
            proj.astype(jnp.bfloat16),
            imf.astype(jnp.float32)]
    in_specs = ([_full_spec(a.shape) for a in args]
                + [pl.BlockSpec(memory_space=pltpu.MemorySpace.SMEM)])
    return pl.pallas_call(
        functools.partial(_text_head_kernel, n_cls=n_cls),
        grid=(1,),
        out_shape=jax.ShapeDtypeStruct((B, n_cls), jnp.float32),
        in_specs=in_specs,
        out_specs=_full_spec((B, n_cls)),
    )(*args, scale)


# ----------------------------------------------------------------------------
# Full CoOp forward (inference): logits + cross-entropy loss
# ----------------------------------------------------------------------------
def coop_forward(s_n, x, adj, label, p):
    # ---- image encoder: fused 2-layer GCN (synthetic clip_model.gnn) ----
    node_feats = pallas_gcn(x, adj, p['W_g1'], p['b_g1'], p['W_g2'], p['b_g2'])
    imf_raw = node_feats[s_n]                                 # (B, gnn_output)

    # ---- fused L2-norm + meta-net MLP -> per-image context shift ----
    imf, bias = pallas_imf_meta(imf_raw, p['Wm1'], p['bm1'], p['Wm2'], p['bm2'])

    ctx_shifted = p['ctx'][None] + bias[:, None, :]           # (B, n_ctx, D)
    B = imf.shape[0]
    n_cls = p['prefix'].shape[0]
    prefix = jnp.broadcast_to(p['prefix'][None], (B,) + p['prefix'].shape)
    suffix = jnp.broadcast_to(p['suffix'][None], (B,) + p['suffix'].shape)
    ctx_b = jnp.broadcast_to(ctx_shifted[:, None],
                             (B, n_cls) + ctx_shifted.shape[1:])
    prompts = jnp.concatenate([prefix, ctx_b, suffix], axis=2)   # (B, n_cls, L, D)

    # ---- text encoder ----
    L, D = prompts.shape[2], prompts.shape[3]
    Nb = B * n_cls
    tx = prompts.reshape(Nb, L, D)
    tx = pallas_text_block(tx, p, num_heads=p['num_heads'])      # (Nb, L, D) bf16

    onehot = jax.nn.one_hot(p['eot_idx'], L, dtype=jnp.float32)  # (n_cls, L)
    onehot = jnp.tile(onehot, (B, 1))                            # (Nb, L)

    # ---- fused EOT pool + ln_final + projection + norm + cosine logits ----
    logits = pallas_text_head(tx, onehot, p['lnf_g'], p['lnf_b'],
                              p['text_proj'], imf, p['logit_scale_exp'], n_cls)

    # ---- cross-entropy ----
    logz = jax.nn.logsumexp(logits, axis=-1)
    picked = jnp.take_along_axis(logits, label[:, None], axis=-1)[:, 0]
    loss = jnp.mean(logz - picked)
    # TODO(synk): loss.backward() + Adam step on prompt_learner params not
    # implemented (forward-only Pallas translation).
    return logits, loss


# ----------------------------------------------------------------------------
if __name__ == "__main__":
    # small, module-consistent dims
    N_NODES, D_IN = 16, 32
    GNN_HID, GNN_OUT = 32, 64            # args.gnn_output = 64  (64 // 16 = 4)
    N_CLS, N_CTX, CTX_DIM = 3, 4, 32     # args.transformer_width = ctx_dim = 32
    CTX_LEN = 8                          # args.context_length
    NUM_HEADS, MLP_DIM, EMBED = 2, 4 * CTX_DIM, GNN_OUT
    B = 2

    key = jax.random.PRNGKey(0)
    ks = list(jax.random.split(key, 24))

    def nrm(k, shape, std=0.02):
        return (std * jax.random.normal(k, shape)).astype(jnp.float32)

    # graph inputs
    x = nrm(ks[0], (N_NODES, D_IN), 1.0)
    a_raw = (jax.random.uniform(ks[1], (N_NODES, N_NODES)) > 0.7).astype(jnp.float32)
    adj = a_raw + a_raw.T + jnp.eye(N_NODES, dtype=jnp.float32)
    adj = adj / jnp.sum(adj, axis=-1, keepdims=True)
    s_n = jnp.array([3, 7], dtype=jnp.int32)
    label = jnp.array([0, 2], dtype=jnp.int32)

    # synthetic tokenized prompts -> EOT index = argmax over token ids
    tok = jnp.zeros((N_CLS, CTX_LEN), jnp.int32)
    tok = tok.at[jnp.arange(N_CLS), jnp.array([6, 7, 6])].set(49407)
    eot_idx = jnp.argmax(tok, axis=-1)

    params = {
        # GNN (frozen image encoder)
        'W_g1': nrm(ks[2], (D_IN, GNN_HID), 0.1), 'b_g1': jnp.zeros((GNN_HID,)),
        'W_g2': nrm(ks[3], (GNN_HID, GNN_OUT), 0.1), 'b_g2': jnp.zeros((GNN_OUT,)),
        # prompt learner
        'ctx': nrm(ks[4], (N_CTX, CTX_DIM), 0.02),
        'Wm1': nrm(ks[5], (GNN_OUT, GNN_OUT // 16), 0.05),
        'bm1': jnp.zeros((GNN_OUT // 16,)),
        'Wm2': nrm(ks[6], (GNN_OUT // 16, CTX_DIM), 0.05),
        'bm2': jnp.zeros((CTX_DIM,)),
        'prefix': nrm(ks[7], (N_CLS, 1, CTX_DIM), 0.02),          # token_prefix buffer
        'suffix': nrm(ks[8], (N_CLS, CTX_LEN - 1 - N_CTX, CTX_DIM), 0.02),
        # text encoder
        'pos_emb': nrm(ks[9], (CTX_LEN, CTX_DIM), 0.01),
        'ln1_g': jnp.ones((CTX_DIM,)), 'ln1_b': jnp.zeros((CTX_DIM,)),
        'Wqkv': nrm(ks[10], (CTX_DIM, 3 * CTX_DIM), 0.05),
        'bqkv': jnp.zeros((3 * CTX_DIM,)),
        'Wo': nrm(ks[11], (CTX_DIM, CTX_DIM), 0.05), 'bo': jnp.zeros((CTX_DIM,)),
        'ln2_g': jnp.ones((CTX_DIM,)), 'ln2_b': jnp.zeros((CTX_DIM,)),
        'Wfc': nrm(ks[12], (CTX_DIM, MLP_DIM), 0.05), 'bfc': jnp.zeros((MLP_DIM,)),
        'Wproj': nrm(ks[13], (MLP_DIM, CTX_DIM), 0.05),
        'bproj': jnp.zeros((CTX_DIM,)),
        'lnf_g': jnp.ones((CTX_DIM,)), 'lnf_b': jnp.zeros((CTX_DIM,)),
        'text_proj': nrm(ks[14], (CTX_DIM, EMBED), CTX_DIM ** -0.5),
        'logit_scale_exp': jnp.float32(math.exp(math.log(1.0 / 0.07))),
        'eot_idx': eot_idx,
        'num_heads': NUM_HEADS,
    }

    logits, loss = coop_forward(s_n, x, adj, label, params)
    jax.block_until_ready(logits)
    jax.block_until_ready(loss)
    assert logits.shape == (B, N_CLS)
    assert bool(jnp.isfinite(loss))
    print("KERNEL_OK")
</pallas_src>

<mosaic_0001>
module attributes {stable_mosaic.version = 11 : i64} {
  func.func @_gcn_kernel(%arg0: i32, %arg1: memref<16x32xbf16, #tpu.memory_space<vmem>>, %arg2: memref<16x16xbf16, #tpu.memory_space<vmem>>, %arg3: memref<32x32xbf16, #tpu.memory_space<vmem>>, %arg4: memref<1x32xf32, #tpu.memory_space<vmem>>, %arg5: memref<32x64xbf16, #tpu.memory_space<vmem>>, %arg6: memref<1x64xf32, #tpu.memory_space<vmem>>, %arg7: memref<16x64xf32, #tpu.memory_space<vmem>>) attributes {dimension_semantics = [#tpu.dimension_semantics<arbitrary>], iteration_bounds = array<i64: 1>, scalar_prefetch = 0 : i64, scratch_operands = 0 : i64, tpu.core_type = #tpu.core_type<tc>, window_params = [{pipeline_mode = #tpu.pipeline_mode<synchronous>, transform_indices = @transform_0, window_bounds = array<i64: 16, 32>}, {pipeline_mode = #tpu.pipeline_mode<synchronous>, transform_indices = @transform_1, window_bounds = array<i64: 16, 16>}, {pipeline_mode = #tpu.pipeline_mode<synchronous>, transform_indices = @transform_2, window_bounds = array<i64: 32, 32>}, {pipeline_mode = #tpu.pipeline_mode<synchronous>, transform_indices = @transform_3, window_bounds = array<i64: 1, 32>}, {pipeline_mode = #tpu.pipeline_mode<synchronous>, transform_indices = @transform_4, window_bounds = array<i64: 32, 64>}, {pipeline_mode = #tpu.pipeline_mode<synchronous>, transform_indices = @transform_5, window_bounds = array<i64: 1, 64>}, {pipeline_mode = #tpu.pipeline_mode<synchronous>, transform_indices = @transform_6, window_bounds = array<i64: 16, 64>}]} {
    %c0 = arith.constant 0 : index
    %c0_0 = arith.constant 0 : index
    %0 = vector.load %arg1[%c0, %c0_0] : memref<16x32xbf16, #tpu.memory_space<vmem>>, vector<16x32xbf16>
    %c0_1 = arith.constant 0 : index
    %c0_2 = arith.constant 0 : index
    %1 = vector.load %arg2[%c0_1, %c0_2] : memref<16x16xbf16, #tpu.memory_space<vmem>>, vector<16x16xbf16>
    %c0_3 = arith.constant 0 : index
    %c0_4 = arith.constant 0 : index
    %2 = vector.load %arg3[%c0_3, %c0_4] : memref<32x32xbf16, #tpu.memory_space<vmem>>, vector<32x32xbf16>
    %cst = arith.constant dense<0.000000e+00> : vector<16x32xf32>
    %3 = tpu.matmul %0, %2, %cst {dimension_numbers = #tpu.dot_dimension_numbers<[1], [0], [0], [1], [0, 0, 1, 1], [], []>} : vector<16x32xbf16>, vector<32x32xbf16>, vector<16x32xf32> -> vector<16x32xf32>
    %4 = arith.truncf %3 : vector<16x32xf32> to vector<16x32xbf16>
    %cst_5 = arith.constant dense<0.000000e+00> : vector<16x32xf32>
    %5 = tpu.matmul %1, %4, %cst_5 {dimension_numbers = #tpu.dot_dimension_numbers<[1], [0], [0], [1], [0, 0, 1, 1], [], []>} : vector<16x16xbf16>, vector<16x32xbf16>, vector<16x32xf32> -> vector<16x32xf32>
    %c0_6 = arith.constant 0 : index
    %c0_7 = arith.constant 0 : index
    %6 = vector.load %arg4[%c0_6, %c0_7] : memref<1x32xf32, #tpu.memory_space<vmem>>, vector<1x32xf32>
    %7 = vector.broadcast %6 : vector<1x32xf32> to vector<16x32xf32>
    %8 = arith.addf %5, %7 : vector<16x32xf32>
    %cst_8 = arith.constant 0.000000e+00 : f32
    %9 = vector.broadcast %cst_8 : f32 to vector<16x32xf32>
    %10 = arith.maximumf %8, %9 : vector<16x32xf32>
    %11 = arith.truncf %10 : vector<16x32xf32> to vector<16x32xbf16>
    %c0_9 = arith.constant 0 : index
    %c0_10 = arith.constant 0 : index
    %12 = vector.load %arg5[%c0_9, %c0_10] : memref<32x64xbf16, #tpu.memory_space<vmem>>, vector<32x64xbf16>
    %cst_11 = arith.constant dense<0.000000e+00> : vector<16x64xf32>
    %13 = tpu.matmul %11, %12, %cst_11 {dimension_numbers = #tpu.dot_dimension_numbers<[1], [0], [0], [1], [0, 0, 1, 1], [], []>} : vector<16x32xbf16>, vector<32x64xbf16>, vector<16x64xf32> -> vector<16x64xf32>
    %14 = arith.truncf %13 : vector<16x64xf32> to vector<16x64xbf16>
    %cst_12 = arith.constant dense<0.000000e+00> : vector<16x64xf32>
    %15 = tpu.matmul %1, %14, %cst_12 {dimension_numbers = #tpu.dot_dimension_numbers<[1], [0], [0], [1], [0, 0, 1, 1], [], []>} : vector<16x16xbf16>, vector<16x64xbf16>, vector<16x64xf32> -> vector<16x64xf32>
    %c0_13 = arith.constant 0 : index
    %c0_14 = arith.constant 0 : index
    %16 = vector.load %arg6[%c0_13, %c0_14] : memref<1x64xf32, #tpu.memory_space<vmem>>, vector<1x64xf32>
    %17 = vector.broadcast %16 : vector<1x64xf32> to vector<16x64xf32>
    %18 = arith.addf %15, %17 : vector<16x64xf32>
    %c0_15 = arith.constant 0 : index
    %c0_16 = arith.constant 0 : index
    %19 = vector.load %arg7[%c0_15, %c0_16] : memref<16x64xf32, #tpu.memory_space<vmem>>, vector<16x64xf32>
    tpu.vector_store %arg7[%c0_15, %c0_16], %18 {strides = array<i32>} : memref<16x64xf32, #tpu.memory_space<vmem>>, vector<16x64xf32>,
    return
  }
  func.func @transform_0(%arg0: i32) -> (i32, i32) {
    %c0_i32 = arith.constant 0 : i32
    %c0_i32_0 = arith.constant 0 : i32
    %c0_i32_1 = arith.constant 0 : i32
    return %c0_i32, %c0_i32_0 : i32, i32
  }
  func.func @transform_1(%arg0: i32) -> (i32, i32) {
    %c0_i32 = arith.constant 0 : i32
    %c0_i32_0 = arith.constant 0 : i32
    %c0_i32_1 = arith.constant 0 : i32
    return %c0_i32, %c0_i32_0 : i32, i32
  }
  func.func @transform_2(%arg0: i32) -> (i32, i32) {
    %c0_i32 = arith.constant 0 : i32
    %c0_i32_0 = arith.constant 0 : i32
    %c0_i32_1 = arith.constant 0 : i32
    return %c0_i32, %c0_i32_0 : i32, i32
  }
  func.func @transform_3(%arg0: i32) -> (i32, i32) {
    %c0_i32 = arith.constant 0 : i32
    %c0_i32_0 = arith.constant 0 : i32
    %c0_i32_1 = arith.constant 0 : i32
    return %c0_i32, %c0_i32_0 : i32, i32
  }
  func.func @transform_4(%arg0: i32) -> (i32, i32) {
    %c0_i32 = arith.constant 0 : i32
    %c0_i32_0 = arith.constant 0 : i32
    %c0_i32_1 = arith.constant 0 : i32
    return %c0_i32, %c0_i32_0 : i32, i32
  }
  func.func @transform_5(%arg0: i32) -> (i32, i32) {
    %c0_i32 = arith.constant 0 : i32
    %c0_i32_0 = arith.constant 0 : i32
    %c0_i32_1 = arith.constant 0 : i32
    return %c0_i32, %c0_i32_0 : i32, i32
  }
  func.func @transform_6(%arg0: i32) -> (i32, i32) {
    %c0_i32 = arith.constant 0 : i32
    %c0_i32_0 = arith.constant 0 : i32
    %c0_i32_1 = arith.constant 0 : i32
    return %c0_i32, %c0_i32_0 : i32, i32
  }
}

</mosaic_0001>

<llo_original>
// kernel: tpu_custom_call.1
$region0: #{tpu_custom_call.1}
  #allocation0 [shape = 'u32[]', space=smem, size = 0x4, offset = 0x4, fixed_abs, tag = 'smem constant byte address 0x4 - core index']
  #allocation1 [shape = 'u32[144,128]{1,0:T(1,128)}', space=vmem, size = 0x12000, scoped, tag = 'internal scratch']
  %s0 = inlined_call_operand.hbm [shape: bf16[16,32], index: 0, kind: input, shape index: {}]
  %s1 = inlined_call_operand.hbm [shape: bf16[16,16], index: 1, kind: input, shape index: {}]
  %s2 = inlined_call_operand.hbm [shape: bf16[32,32], index: 2, kind: input, shape index: {}]
  %s3 = inlined_call_operand.vmem [shape: f32[1,32], index: 3, kind: input, shape index: {}]
  %s4 = inlined_call_operand.hbm [shape: bf16[32,64], index: 4, kind: input, shape index: {}]
  %s5 = inlined_call_operand.vmem [shape: f32[1,64], index: 5, kind: input, shape index: {}]
  %s6 = inlined_call_operand.hbm [shape: f32[16,64], index: 6, kind: output, shape index: {}]
  %s7 = sld [smem:[#allocation0]]
  $region50: #{tpu_custom_call.1} parent=0
    _
  %s9 = ssub.s32 1, %s7
  %s10 = scalar_select 0, %s9, %s7
  $region1: #{tpu_custom_call.1} parent=0
    #allocation2 [shape = 'u8[4096]{0}', space=vmem, size = 0x1000, scoped, tag = 'input window, operand 0, single buffered']
    #allocation3 [shape = 's32[1]{0}', space=sflag, size = 0x4, scoped, tag = 'scoped memory for tpu_custom_call.1']
    #allocation4 [shape = 's32[1]{0}', space=sflag, size = 0x4, scoped, tag = 'scoped memory for tpu_custom_call.1']
    #allocation5 [shape = 'u8[4096]{0}', space=vmem, size = 0x1000, scoped, tag = 'input window, operand 1, single buffered']
    #allocation6 [shape = 's32[1]{0}', space=sflag, size = 0x4, scoped, tag = 'scoped memory for tpu_custom_call.1']
    #allocation7 [shape = 'u8[8192]{0}', space=vmem, size = 0x2000, scoped, tag = 'input window, operand 2, single buffered']
    #allocation8 [shape = 'u8[8192]{0}', space=vmem, size = 0x2000, scoped, tag = 'input window, operand 4, single buffered']
    #allocation9 [shape = 's32[1]{0}', space=sflag, size = 0x4, scoped, tag = 'scoped memory for tpu_custom_call.1']
    #allocation10 [shape = 'u8[8192]{0}', space=vmem, size = 0x2000, scoped, tag = 'output window, operand 0, single buffered']
    %11 = vsyncpa [#allocation3], 0
    %12 = vsyncpa [#allocation6], 0
    %13 = vsyncpa [#allocation9], 0
    %14 = vsyncpa [#allocation4], 0
    // Predicated region
    $region2: #{tpu_custom_call.1} parent=1 // pred_check
      _
    $region3: #{tpu_custom_call.1} parent=1 // pred_check_branch
      %16 = sbr.rel (0) target = $region5
    $region4: #{tpu_custom_call.1} parent=1 // pred_region
      %s18 = ssub.s32 128, 128
      %19 = vsyncadd [#allocation3], %s18
      %s20 = sshll.u32 [#allocation2], 4
      %s21 = int_to_ptr.vmem [resolvable:$true] %s20
      %26 = dma.hbm_to_vmem [thread:$0]  %s0, 128, %s21, [#allocation3], 64, 64, 4
    $region5: #{tpu_custom_call.1} parent=1 // pred_fallthru
      _
    // Predicated region
    $region6: #{tpu_custom_call.1} parent=1 // pred_check
      _
    $region7: #{tpu_custom_call.1} parent=1 // pred_check_branch
      %28 = sbr.rel (0) target = $region9
    $region8: #{tpu_custom_call.1} parent=1 // pred_region
      %s30 = ssub.s32 128, 128
      %31 = vsyncadd [#allocation6], %s30
      %s32 = sshll.u32 [#allocation5], 4
      %s33 = int_to_ptr.vmem [resolvable:$true] %s32
      %38 = dma.hbm_to_vmem [thread:$0]  %s1, 128, %s33, [#allocation6], 64, 64, 4
    $region9: #{tpu_custom_call.1} parent=1 // pred_fallthru
      _
    // Predicated region
    $region10: #{tpu_custom_call.1} parent=1 // pred_check
      _
    $region11: #{tpu_custom_call.1} parent=1 // pred_check_branch
      %40 = sbr.rel (0) target = $region13
    $region12: #{tpu_custom_call.1} parent=1 // pred_region
      %s42 = ssub.s32 256, 256
      %43 = vsyncadd [#allocation6], %s42
      %s44 = sshll.u32 [#allocation7], 4
      %s45 = int_to_ptr.vmem [resolvable:$true] %s44
      %50 = dma.hbm_to_vmem [thread:$0]  %s2, 256, %s45, [#allocation6], 64, 64, 4
    $region13: #{tpu_custom_call.1} parent=1 // pred_fallthru
      _
    // Predicated region
    $region14: #{tpu_custom_call.1} parent=1 // pred_check
      _
    $region15: #{tpu_custom_call.1} parent=1 // pred_check_branch
      %52 = sbr.rel (0) target = $region17
    $region16: #{tpu_custom_call.1} parent=1 // pred_region
      _
    $region17: #{tpu_custom_call.1} parent=1 // pred_fallthru
      _
    // Predicated region
    $region18: #{tpu_custom_call.1} parent=1 // pred_check
      _
    $region19: #{tpu_custom_call.1} parent=1 // pred_check_branch
      %54 = sbr.rel (0) target = $region21
    $region20: #{tpu_custom_call.1} parent=1 // pred_region
      %s56 = ssub.s32 256, 256
      %57 = vsyncadd [#allocation9], %s56
      %s58 = sshll.u32 [#allocation8], 4
      %s59 = int_to_ptr.vmem [resolvable:$true] %s58
      %64 = dma.hbm_to_vmem [thread:$0]  %s4, 256, %s59, [#allocation9], 64, 64, 4
    $region21: #{tpu_custom_call.1} parent=1 // pred_fallthru
      _
    // Predicated region
    $region22: #{tpu_custom_call.1} parent=1 // pred_check
      _
    $region23: #{tpu_custom_call.1} parent=1 // pred_check_branch
      %66 = sbr.rel (0) target = $region25
    $region24: #{tpu_custom_call.1} parent=1 // pred_region
      _
    $region25: #{tpu_custom_call.1} parent=1 // pred_fallthru
      _
    // Predicated region
    $region26: #{tpu_custom_call.1} parent=1 // pred_check
      _
    $region27: #{tpu_custom_call.1} parent=1 // pred_check_branch
      %68 = sbr.rel (0) target = $region29
    $region28: #{tpu_custom_call.1} parent=1 // pred_region
      %69 = dma.done [#allocation3], 128
    $region29: #{tpu_custom_call.1} parent=1 // pred_fallthru
      _
    // Predicated region
    $region30: #{tpu_custom_call.1} parent=1 // pred_check
      _
    $region31: #{tpu_custom_call.1} parent=1 // pred_check_branch
      %71 = sbr.rel (0) target = $region33
    $region32: #{tpu_custom_call.1} parent=1 // pred_region
      %72 = dma.done [#allocation6], 128
    $region33: #{tpu_custom_call.1} parent=1 // pred_fallthru
      _
    // Predicated region
    $region34: #{tpu_custom_call.1} parent=1 // pred_check
      _
    $region35: #{tpu_custom_call.1} parent=1 // pred_check_branch
      %74 = sbr.rel (0) target = $region37
    $region36: #{tpu_custom_call.1} parent=1 // pred_region
      %75 = dma.done [#allocation6], 256
    $region37: #{tpu_custom_call.1} parent=1 // pred_fallthru
      _
    // Predicated region
    $region38: #{tpu_custom_call.1} parent=1 // pred_check
      _
    $region39: #{tpu_custom_call.1} parent=1 // pred_check_branch
      %77 = sbr.rel (0) target = $region41
    $region40: #{tpu_custom_call.1} parent=1 // pred_region
      %78 = dma.done [#allocation9], 256
    $region41: #{tpu_custom_call.1} parent=1 // pred_fallthru
      _
    %v80 = vld [vmem:[#allocation2] sm:$0xf]
    %v81 = vld [vmem:[#allocation2 + $0x4] sm:$0xf]
    %v82 = vld [vmem:[#allocation5] sm:$0xf]
    %v83 = vld [vmem:[#allocation5 + $0x4] sm:$0xf]
    %v84 = vld [vmem:[#allocation7] sm:$0xf]
    %v85 = vld [vmem:[#allocation7 + $0x4] sm:$0xf]
    %v86 = vld [vmem:[#allocation7 + $0x8] sm:$0xf]
    %v87 = vld [vmem:[#allocation7 + $0xc] sm:$0xf]
    %v90 = vunpack.c.l.b16 %v80
    %v91 = vunpack.c.l.b16 %v81
    %v92 = vpack.c.b16 %v91, %v90
    %v97 = vunpack.c.l.b16 %v84
    %v98 = vunpack.c.l.b16 %v85
    %v99 = vunpack.c.l.b16 %v86
    %v100 = vunpack.c.l.b16 %v87
    %v101 = vpack.c.b16 %v98, %v97
    %v102 = vpack.c.b16 %v100, %v99
    %vm105 = vcmask 261120
    %v107 = vsel %vm105, %v92, 0
    %109 = vmatprep.subr.bf16.mxu0 0
    %110 = vmatpush1.bf16.msra.mxu0 %v101
    %111 = vmatprep.subr.bf16.mxu0 0
    %112 = vmatpush1.bf16.msra.mxu0 %v102
    %113 = vmatprep.subr.bf16.mxu0 0
    %114 = vmatpush1.bf16.msra.mxu0 0
    %115 = vmatprep.subr.bf16.mxu0 0
    %116 = vmatpush1.bf16.msra.mxu0 0
    %117 = vmatprep.subr.bf16.mxu0 0
    %118 = vmatpush1.bf16.msra.mxu0 0
    %119 = vmatprep.subr.bf16.mxu0 0
    %120 = vmatpush1.bf16.msra.mxu0 0
    %121 = vmatprep.subr.bf16.mxu0 0
    %122 = vmatpush1.bf16.msra.mxu0 0
    %123 = vmatprep.subr.bf16.mxu0 0
    %124 = vmatpush1.bf16.msra.mxu0 0
    %125 = vmatprep.subr.bf16.mxu0 0
    %126 = vmatpush1.bf16.msra.mxu0 0
    %127 = vmatprep.subr.bf16.mxu0 0
    %128 = vmatpush1.bf16.msra.mxu0 0
    %129 = vmatprep.subr.bf16.mxu0 0
    %130 = vmatpush1.bf16.msra.mxu0 0
    %131 = vmatprep.subr.bf16.mxu0 0
    %132 = vmatpush1.bf16.msra.mxu0 0
    %133 = vmatprep.subr.bf16.mxu0 0
    %134 = vmatpush1.bf16.msra.mxu0 0
    %135 = vmatprep.subr.bf16.mxu0 0
    %136 = vmatpush1.bf16.msra.mxu0 0
    %137 = vmatprep.subr.bf16.mxu0 0
    %138 = vmatpush1.bf16.msra.mxu0 0
    %139 = vmatprep.subr.bf16.mxu0 0
    %140 = vmatpush1.bf16.msra.mxu0 0
    %141 = vmatprep.mubr.bf16.mxu0 0
    %142 = vmatmul.mubr.bf16.gmra.mrb[0].mxu0 %v107
    %v143 = vpop.f32.mrb[0].mxu0
    %v144 = vadd.f32 0.0, %v143
    %v145 = vpop.f32.mrb[0].mxu0
    %v146 = vpop.f32.mrb[0].mxu0
    %v147 = vadd.f32 0.0, %v146
    %v148 = vpop.f32.mrb[0].mxu0
    %149 = vdwg.mxu0
    %v150 = vpack.c.bf16 %v147, %v144
    %v151 = vld [vmem:[%s3] sm:$0x1]
    %v153 = vlaneseq
    %v154 = vshrl.u32 %v153, 7
    %v155 = vsub.s32 0, %v154
    %v156 = vrot.slane %v151, %v155
    %v160 = vunpack.c.l.b16 %v82
    %v161 = vunpack.c.l.b16 %v83
    %v162 = vpack.c.b16 %v161, %v160
    %vm163 = vcmask 130048
    %v165 = vsel %vm163, %v162, 0
    %167 = vmatprep.subr.bf16.mxu0 0
    %168 = vmatpush1.bf16.msra.mxu0 %v150
    %169 = vmatprep.subr.bf16.mxu0 0
    %170 = vmatpush1.bf16.msra.mxu0 0
    %171 = vmatprep.subr.bf16.mxu0 0
    %172 = vmatpush1.bf16.msra.mxu0 0
    %173 = vmatprep.subr.bf16.mxu0 0
    %174 = vmatpush1.bf16.msra.mxu0 0
    %175 = vmatprep.subr.bf16.mxu0 0
    %176 = vmatpush1.bf16.msra.mxu0 0
    %177 = vmatprep.subr.bf16.mxu0 0
    %178 = vmatpush1.bf16.msra.mxu0 0
    %179 = vmatprep.subr.bf16.mxu0 0
    %180 = vmatpush1.bf16.msra.mxu0 0
    %181 = vmatprep.subr.bf16.mxu0 0
    %182 = vmatpush1.bf16.msra.mxu0 0
    %183 = vmatprep.subr.bf16.mxu0 0
    %184 = vmatpush1.bf16.msra.mxu0 0
    %185 = vmatprep.subr.bf16.mxu0 0
    %186 = vmatpush1.bf16.msra.mxu0 0
    %187 = vmatprep.subr.bf16.mxu0 0
    %188 = vmatpush1.bf16.msra.mxu0 0
    %189 = vmatprep.subr.bf16.mxu0 0
    %190 = vmatpush1.bf16.msra.mxu0 0
    %191 = vmatprep.subr.bf16.mxu0 0
    %192 = vmatpush1.bf16.msra.mxu0 0
    %193 = vmatprep.subr.bf16.mxu0 0
    %194 = vmatpush1.bf16.msra.mxu0 0
    %195 = vmatprep.subr.bf16.mxu0 0
    %196 = vmatpush1.bf16.msra.mxu0 0
    %197 = vmatprep.subr.bf16.mxu0 0
    %198 = vmatpush1.bf16.msra.mxu0 0
    %199 = vmatprep.mubr.bf16.mxu0 0
    %200 = vmatmul.mubr.bf16.gmra.mrb[0].mxu0 %v165
    %v201 = vpop.f32.mrb[0].mxu0
    %v202 = vadd.f32 %v156, %v201
    %v203 = vpop.f32.mrb[0].mxu0
    %v204 = vpop.f32.mrb[0].mxu0
    %v205 = vadd.f32 %v156, %v204
    %v206 = vpop.f32.mrb[0].mxu0
    %207 = vdwg.mxu0
    %v208 = vmax.f32 %v202, 0.0
    %v209 = vmax.f32 %v205, 0.0
    %v210 = vpack.c.bf16 %v209, %v208
    %v211 = vld [vmem:[#allocation8] sm:$0xf]
    %v212 = vld [vmem:[#allocation8 + $0x4] sm:$0xf]
    %v213 = vld [vmem:[#allocation8 + $0x8] sm:$0xf]
    %v214 = vld [vmem:[#allocation8 + $0xc] sm:$0xf]
    %v219 = vunpack.c.l.b16 %v211
    %v220 = vunpack.c.l.b16 %v212
    %v221 = vunpack.c.l.b16 %v213
    %v222 = vunpack.c.l.b16 %v214
    %v223 = vpack.c.b16 %v220, %v219
    %v224 = vpack.c.b16 %v222, %v221
    %v228 = vsel %vm105, %v210, 0
    %230 = vmatprep.subr.bf16.mxu0 0
    %231 = vmatpush1.bf16.msra.mxu0 %v223
    %232 = vmatprep.subr.bf16.mxu0 0
    %233 = vmatpush1.bf16.msra.mxu0 %v224
    %234 = vmatprep.subr.bf16.mxu0 0
    %235 = vmatpush1.bf16.msra.mxu0 0
    %236 = vmatprep.subr.bf16.mxu0 0
    %237 = vmatpush1.bf16.msra.mxu0 0
    %238 = vmatprep.subr.bf16.mxu0 0
    %239 = vmatpush1.bf16.msra.mxu0 0
    %240 = vmatprep.subr.bf16.mxu0 0
    %241 = vmatpush1.bf16.msra.mxu0 0
    %242 = vmatprep.subr.bf16.mxu0 0
    %243 = vmatpush1.bf16.msra.mxu0 0
    %244 = vmatprep.subr.bf16.mxu0 0
    %245 = vmatpush1.bf16.msra.mxu0 0
    %246 = vmatprep.subr.bf16.mxu0 0
    %247 = vmatpush1.bf16.msra.mxu0 0
    %248 = vmatprep.subr.bf16.mxu0 0
    %249 = vmatpush1.bf16.msra.mxu0 0
    %250 = vmatprep.subr.bf16.mxu0 0
    %251 = vmatpush1.bf16.msra.mxu0 0
    %252 = vmatprep.subr.bf16.mxu0 0
    %253 = vmatpush1.bf16.msra.mxu0 0
    %254 = vmatprep.subr.bf16.mxu0 0
    %255 = vmatpush1.bf16.msra.mxu0 0
    %256 = vmatprep.subr.bf16.mxu0 0
    %257 = vmatpush1.bf16.msra.mxu0 0
    %258 = vmatprep.subr.bf16.mxu0 0
    %259 = vmatpush1.bf16.msra.mxu0 0
    %260 = vmatprep.subr.bf16.mxu0 0
    %261 = vmatpush1.bf16.msra.mxu0 0
    %262 = vmatprep.mubr.bf16.mxu0 0
    %263 = vmatmul.mubr.bf16.gmra.mrb[0].mxu0 %v228
    %v264 = vpop.f32.mrb[0].mxu0
    %v265 = vadd.f32 0.0, %v264
    %v266 = vpop.f32.mrb[0].mxu0
    %v267 = vpop.f32.mrb[0].mxu0
    %v268 = vadd.f32 0.0, %v267
    %v269 = vpop.f32.mrb[0].mxu0
    %270 = vdwg.mxu0
    %v271 = vpack.c.bf16 %v268, %v265
    %v272 = vld [vmem:[%s5] sm:$0x1]
    %v274 = vlaneseq
    %v275 = vshrl.u32 %v274, 7
    %v276 = vsub.s32 0, %v275
    %v277 = vrot.slane %v272, %v276
    %279 = vmatprep.subr.bf16.mxu0 0
    %280 = vmatpush1.bf16.msra.mxu0 %v271
    %281 = vmatprep.subr.bf16.mxu0 0
    %282 = vmatpush1.bf16.msra.mxu0 0
    %283 = vmatprep.subr.bf16.mxu0 0
    %284 = vmatpush1.bf16.msra.mxu0 0
    %285 = vmatprep.subr.bf16.mxu0 0
    %286 = vmatpush1.bf16.msra.mxu0 0
    %287 = vmatprep.subr.bf16.mxu0 0
    %288 = vmatpush1.bf16.msra.mxu0 0
    %289 = vmatprep.subr.bf16.mxu0 0
    %290 = vmatpush1.bf16.msra.mxu0 0
    %291 = vmatprep.subr.bf16.mxu0 0
    %292 = vmatpush1.bf16.msra.mxu0 0
    %293 = vmatprep.subr.bf16.mxu0 0
    %294 = vmatpush1.bf16.msra.mxu0 0
    %295 = vmatprep.subr.bf16.mxu0 0
    %296 = vmatpush1.bf16.msra.mxu0 0
    %297 = vmatprep.subr.bf16.mxu0 0
    %298 = vmatpush1.bf16.msra.mxu0 0
    %299 = vmatprep.subr.bf16.mxu0 0
    %300 = vmatpush1.bf16.msra.mxu0 0
    %301 = vmatprep.subr.bf16.mxu0 0
    %302 = vmatpush1.bf16.msra.mxu0 0
    %303 = vmatprep.subr.bf16.mxu0 0
    %304 = vmatpush1.bf16.msra.mxu0 0
    %305 = vmatprep.subr.bf16.mxu0 0
    %306 = vmatpush1.bf16.msra.mxu0 0
    %307 = vmatprep.subr.bf16.mxu0 0
    %308 = vmatpush1.bf16.msra.mxu0 0
    %309 = vmatprep.subr.bf16.mxu0 0
    %310 = vmatpush1.bf16.msra.mxu0 0
    %311 = vmatprep.mubr.bf16.mxu0 0
    %312 = vmatmul.mubr.bf16.gmra.mrb[0].mxu0 %v165
    %v313 = vpop.f32.mrb[0].mxu0
    %v314 = vadd.f32 %v277, %v313
    %v315 = vpop.f32.mrb[0].mxu0
    %v316 = vpop.f32.mrb[0].mxu0
    %v317 = vadd.f32 %v277, %v316
    %v318 = vpop.f32.mrb[0].mxu0
    %319 = vdwg.mxu0
    %vm320 = vcmask 523264
    %321 = vst.msk [vmem:[#allocation10] sm:$0xff] %vm320, %v314
    %322 = vst.msk [vmem:[#allocation10 + $0x8] sm:$0xff] %vm320, %v317
    // Predicated region
    $region42: #{tpu_custom_call.1} parent=1 // pred_check
      _
    $region43: #{tpu_custom_call.1} parent=1 // pred_check_branch
      %324 = sbr.rel (0) target = $region45
    $region44: #{tpu_custom_call.1} parent=1 // pred_region
      %s326 = ssub.s32 256, 256
      %327 = vsyncadd [#allocation4], %s326
      %s328 = sshll.u32 [#allocation10], 4
      %s329 = int_to_ptr.vmem [resolvable:$true] %s328
      %334 = dma.vmem_to_hbm [thread:$0]  %s329, 256, %s6, [#allocation4], 128, 128, 8
    $region45: #{tpu_custom_call.1} parent=1 // pred_fallthru
      _
    // Predicated region
    $region46: #{tpu_custom_call.1} parent=1 // pred_check
      _
    $region47: #{tpu_custom_call.1} parent=1 // pred_check_branch
      %336 = sbr.rel (0) target = $region49
    $region48: #{tpu_custom_call.1} parent=1 // pred_region
      %337 = dma.done [#allocation4], 256
    $region49: #{tpu_custom_call.1} parent=1 // pred_fallthru
      _
    %338 = vsyncpa [#allocation3], 1
    %339 = vsyncpa [#allocation6], 1
    %340 = vsyncpa [#allocation9], 1
    %341 = vsyncpa [#allocation4], 1

</llo_original>
